<compile_context>
chip_gen: v7x
topology: tpu7x:2x2x1
jax: 0.10.0
libtpu: 0.0.40
codegen_flags: <defaults>
</compile_context>

<pallas_src>
import jax
import jax.numpy as jnp
from jax.experimental import pallas as pl
from jax.experimental.pallas import tpu as pltpu  # noqa: F401  (imported per convention)

BN_EPS = 1e-5
NORM_EPS_SQ = 1e-24  # clamp on sum(z*z)  <=>  norm clamp of 1e-12 (F.normalize-style guard)


def inception_kernel(x_ref, gb_ref, wt_ref, b_ref, o_ref):
    # x: (N, in_dim); gb: (2, in_dim) = [gamma; beta]; wt: (in_dim, out_dim);
    # b: (1, out_dim); o: (N, out_dim)
    x = x_ref[...].astype(jnp.float32)
    gb = gb_ref[...].astype(jnp.float32)
    gamma = gb[0:1, :]
    beta = gb[1:2, :]

    # --- BatchNorm1d (training mode: biased batch statistics), single pass over x ---
    inv_n = 1.0 / x.shape[0]
    mean = jnp.sum(x, axis=0, keepdims=True) * inv_n          # (1, in_dim)
    ex2 = jnp.sum(x * x, axis=0, keepdims=True) * inv_n       # (1, in_dim)
    var = ex2 - mean * mean
    scale = gamma * jax.lax.rsqrt(var + BN_EPS)               # (1, in_dim)
    shift = beta - mean * scale                               # (1, in_dim)
    y = x * scale + shift                                     # folded affine: one FMA/elem

    # --- Linear: y @ W^T + b; weight is pre-transposed at init, so this is a plain dot ---
    z = jnp.dot(y, wt_ref[...].astype(jnp.float32),
                preferred_element_type=jnp.float32) + b_ref[...].astype(jnp.float32)

    # --- L2 normalize along features (divide-free: EUP rsqrt * z) ---
    sumsq = jnp.sum(z * z, axis=1, keepdims=True)
    inv_norm = jax.lax.rsqrt(jnp.maximum(sumsq, NORM_EPS_SQ))
    o_ref[...] = (z * inv_norm).astype(o_ref.dtype)


def make_inception_transformation(gamma, beta, weight, bias):
    """One-time parameter prep (amortized): pack gamma/beta, pre-transpose weight.

    gamma/beta: (in_dim,); weight: (out_dim, in_dim); bias: (out_dim,).
    Returns a jitted callable: x (N, in_dim) -> (N, out_dim).
    """
    out_dim, in_dim = weight.shape
    gb = jnp.stack([gamma, beta]).astype(jnp.float32)          # (2, in_dim)
    wt = jnp.asarray(weight).T.astype(jnp.float32)             # (in_dim, out_dim), once
    b2 = jnp.asarray(bias).reshape(1, out_dim).astype(jnp.float32)

    def forward(x):
        N = x.shape[0]
        return pl.pallas_call(
            inception_kernel,
            out_shape=jax.ShapeDtypeStruct((N, out_dim), x.dtype),
            in_specs=[
                pl.BlockSpec((N, in_dim), lambda: (0, 0)),
                pl.BlockSpec((2, in_dim), lambda: (0, 0)),
                pl.BlockSpec((in_dim, out_dim), lambda: (0, 0)),
                pl.BlockSpec((1, out_dim), lambda: (0, 0)),
            ],
            out_specs=pl.BlockSpec((N, out_dim), lambda: (0, 0)),
        )(x, gb, wt, b2)

    return jax.jit(forward)


def reference(x, gamma, beta, weight, bias):
    # Mirrors the PyTorch forward: BN(batch stats) -> Linear -> divide by L2 row norm.
    mean = jnp.mean(x, axis=0, keepdims=True)
    var = jnp.mean((x - mean) ** 2, axis=0, keepdims=True)
    y = (x - mean) / jnp.sqrt(var + BN_EPS) * gamma + beta
    z = y @ weight.T + bias
    norm = jnp.sqrt(jnp.sum(z * z, axis=1, keepdims=True))
    return z / norm


if __name__ == "__main__":
    N, in_dim, out_dim = 8, 32, 16

    key = jax.random.PRNGKey(0)
    kx, kw, kb = jax.random.split(key, 3)

    x = jax.random.normal(kx, (N, in_dim), dtype=jnp.float32)

    # Deterministic parameter init (mirrors PyTorch defaults):
    #   BatchNorm1d: gamma = 1, beta = 0
    #   Linear: U(-1/sqrt(in_dim), 1/sqrt(in_dim)) for weight & bias
    gamma = jnp.ones((in_dim,), dtype=jnp.float32)
    beta = jnp.zeros((in_dim,), dtype=jnp.float32)
    bound = 1.0 / jnp.sqrt(jnp.float32(in_dim))
    weight = jax.random.uniform(
        kw, (out_dim, in_dim), minval=-bound, maxval=bound, dtype=jnp.float32
    )
    bias = jax.random.uniform(
        kb, (out_dim,), minval=-bound, maxval=bound, dtype=jnp.float32
    )

    fwd = make_inception_transformation(gamma, beta, weight, bias)
    out = jax.block_until_ready(fwd(x))

    ref = reference(x, gamma, beta, weight, bias)
    assert out.shape == (N, out_dim)
    assert jnp.allclose(out, ref, atol=1e-5, rtol=1e-5)

    # TODO(synk): dropout branch (self.dropout is not None) omitted — module default is
    # dropout=None; could be added with pltpu.prng_seed / pltpu.stateful_bernoulli.
    # TODO(synk): training-mode running_mean/running_var buffer updates are not emitted;
    # this kernel produces only the forward activations from batch statistics.
    print("KERNEL_OK")
</pallas_src>

<mosaic_0001>
module attributes {stable_mosaic.version = 11 : i64} {
  func.func @inception_kernel(%arg0: memref<8x32xf32, #tpu.memory_space<vmem>>, %arg1: memref<2x32xf32, #tpu.memory_space<vmem>>, %arg2: memref<32x16xf32, #tpu.memory_space<vmem>>, %arg3: memref<1x16xf32, #tpu.memory_space<vmem>>, %arg4: memref<8x16xf32, #tpu.memory_space<vmem>>) attributes {dimension_semantics = [], scalar_prefetch = 0 : i64, scratch_operands = 0 : i64, tpu.core_type = #tpu.core_type<tc>} {
    %c0 = arith.constant 0 : index
    %c0_0 = arith.constant 0 : index
    %0 = vector.load %arg0[%c0, %c0_0] : memref<8x32xf32, #tpu.memory_space<vmem>>, vector<8x32xf32>
    %c0_1 = arith.constant 0 : index
    %c0_2 = arith.constant 0 : index
    %1 = vector.load %arg1[%c0_1, %c0_2] : memref<2x32xf32, #tpu.memory_space<vmem>>, vector<2x32xf32>
    %2 = vector.extract_strided_slice %1 {offsets = [0, 0], sizes = [1, 32], strides = [1, 1]} : vector<2x32xf32> to vector<1x32xf32>
    %3 = vector.extract_strided_slice %1 {offsets = [1, 0], sizes = [1, 32], strides = [1, 1]} : vector<2x32xf32> to vector<1x32xf32>
    %cst = arith.constant dense<0.000000e+00> : vector<32xf32>
    %4 = vector.multi_reduction <add>, %0, %cst [0] : vector<8x32xf32> to vector<32xf32>
    %5 = vector.shape_cast %4 : vector<32xf32> to vector<1x32xf32>
    %cst_3 = arith.constant 1.250000e-01 : f32
    %6 = vector.broadcast %cst_3 : f32 to vector<1x32xf32>
    %7 = arith.mulf %5, %6 : vector<1x32xf32>
    %8 = arith.mulf %0, %0 : vector<8x32xf32>
    %cst_4 = arith.constant dense<0.000000e+00> : vector<32xf32>
    %9 = vector.multi_reduction <add>, %8, %cst_4 [0] : vector<8x32xf32> to vector<32xf32>
    %10 = vector.shape_cast %9 : vector<32xf32> to vector<1x32xf32>
    %cst_5 = arith.constant 1.250000e-01 : f32
    %11 = vector.broadcast %cst_5 : f32 to vector<1x32xf32>
    %12 = arith.mulf %10, %11 : vector<1x32xf32>
    %13 = arith.mulf %7, %7 : vector<1x32xf32>
    %14 = arith.subf %12, %13 : vector<1x32xf32>
    %cst_6 = arith.constant 9.99999974E-6 : f32
    %15 = vector.broadcast %cst_6 : f32 to vector<1x32xf32>
    %16 = arith.addf %14, %15 : vector<1x32xf32>
    %17 = math.rsqrt %16 : vector<1x32xf32>
    %18 = arith.mulf %2, %17 : vector<1x32xf32>
    %19 = arith.mulf %7, %18 : vector<1x32xf32>
    %20 = arith.subf %3, %19 : vector<1x32xf32>
    %21 = vector.broadcast %18 : vector<1x32xf32> to vector<8x32xf32>
    %22 = arith.mulf %0, %21 : vector<8x32xf32>
    %23 = vector.broadcast %20 : vector<1x32xf32> to vector<8x32xf32>
    %24 = arith.addf %22, %23 : vector<8x32xf32>
    %c0_7 = arith.constant 0 : index
    %c0_8 = arith.constant 0 : index
    %25 = vector.load %arg2[%c0_7, %c0_8] : memref<32x16xf32, #tpu.memory_space<vmem>>, vector<32x16xf32>
    %cst_9 = arith.constant dense<0.000000e+00> : vector<8x16xf32>
    %26 = tpu.matmul %24, %25, %cst_9 {dimension_numbers = #tpu.dot_dimension_numbers<[1], [0], [0], [1], [0, 0, 1, 1], [], []>} : vector<8x32xf32>, vector<32x16xf32>, vector<8x16xf32> -> vector<8x16xf32>
    %c0_10 = arith.constant 0 : index
    %c0_11 = arith.constant 0 : index
    %27 = vector.load %arg3[%c0_10, %c0_11] : memref<1x16xf32, #tpu.memory_space<vmem>>, vector<1x16xf32>
    %28 = vector.broadcast %27 : vector<1x16xf32> to vector<8x16xf32>
    %29 = arith.addf %26, %28 : vector<8x16xf32>
    %30 = arith.mulf %29, %29 : vector<8x16xf32>
    %cst_12 = arith.constant dense<0.000000e+00> : vector<8xf32>
    %31 = vector.multi_reduction <add>, %30, %cst_12 [1] : vector<8x16xf32> to vector<8xf32>
    %32 = vector.shape_cast %31 : vector<8xf32> to vector<8x1xf32>
    %cst_13 = arith.constant 1.000000e-24 : f32
    %33 = vector.broadcast %cst_13 : f32 to vector<8x1xf32>
    %34 = arith.maximumf %32, %33 : vector<8x1xf32>
    %35 = math.rsqrt %34 : vector<8x1xf32>
    %36 = vector.broadcast %35 : vector<8x1xf32> to vector<8x16xf32>
    %37 = arith.mulf %29, %36 : vector<8x16xf32>
    %c0_14 = arith.constant 0 : index
    %c0_15 = arith.constant 0 : index
    %38 = vector.load %arg4[%c0_14, %c0_15] : memref<8x16xf32, #tpu.memory_space<vmem>>, vector<8x16xf32>
    tpu.vector_store %arg4[%c0_14, %c0_15], %37 {strides = array<i32>} : memref<8x16xf32, #tpu.memory_space<vmem>>, vector<8x16xf32>,
    return
  }
}

</mosaic_0001>

<llo_original>
// kernel: forward.1
$region0: #{forward.1}
  #allocation0 [shape = 'u32[]', space=smem, size = 0x4, offset = 0x4, fixed_abs, tag = 'smem constant byte address 0x4 - core index']
  #allocation1 [shape = 'u32[144,128]{1,0:T(1,128)}', space=vmem, size = 0x12000, scoped, tag = 'internal scratch']
  %s0 = inlined_call_operand.hbm [shape: f32[8,32], index: 0, kind: input, shape index: {}]
  %s1 = inlined_call_operand.vmem [shape: f32[2,32], index: 1, kind: input, shape index: {}]
  %s2 = inlined_call_operand.hbm [shape: f32[32,16], index: 2, kind: input, shape index: {}]
  %s3 = inlined_call_operand.vmem [shape: f32[1,16], index: 3, kind: input, shape index: {}]
  %s4 = inlined_call_operand.hbm [shape: f32[8,16], index: 4, kind: output, shape index: {}]
  %s5 = sld [smem:[#allocation0]]
  $region34: #{forward.1} parent=0
    _
  %s7 = ssub.s32 1, %s5
  %s8 = scalar_select 0, %s7, %s5
  $region1: #{forward.1} parent=0
    #allocation2 [shape = 'u8[4096]{0}', space=vmem, size = 0x1000, scoped, tag = 'input window, operand 0, single buffered']
    #allocation3 [shape = 's32[1]{0}', space=sflag, size = 0x4, scoped, tag = 'scoped memory for forward.1']
    #allocation4 [shape = 's32[1]{0}', space=sflag, size = 0x4, scoped, tag = 'scoped memory for forward.1']
    #allocation5 [shape = 'u8[16384]{0}', space=vmem, size = 0x4000, scoped, tag = 'input window, operand 2, single buffered']
    #allocation6 [shape = 's32[1]{0}', space=sflag, size = 0x4, scoped, tag = 'scoped memory for forward.1']
    #allocation7 [shape = 'u8[4096]{0}', space=vmem, size = 0x1000, scoped, tag = 'output window, operand 0, single buffered']
    %9 = vsyncpa [#allocation3], 0
    %10 = vsyncpa [#allocation6], 0
    %11 = vsyncpa [#allocation4], 0
    // Predicated region
    $region2: #{forward.1} parent=1 // pred_check
      _
    $region3: #{forward.1} parent=1 // pred_check_branch
      %13 = sbr.rel (0) target = $region5
    $region4: #{forward.1} parent=1 // pred_region
      %s15 = ssub.s32 128, 128
      %16 = vsyncadd [#allocation3], %s15
      %s18 = sshll.u32 [#allocation2], 4
      %s19 = int_to_ptr.vmem [resolvable:$true] %s18
      %21 = dma.hbm_to_vmem [thread:$0]  %s0, 128, %s19, [#allocation3]
    $region5: #{forward.1} parent=1 // pred_fallthru
      _
    // Predicated region
    $region6: #{forward.1} parent=1 // pred_check
      _
    $region7: #{forward.1} parent=1 // pred_check_branch
      %23 = sbr.rel (0) target = $region9
    $region8: #{forward.1} parent=1 // pred_region
      _
    $region9: #{forward.1} parent=1 // pred_fallthru
      _
    // Predicated region
    $region10: #{forward.1} parent=1 // pred_check
      _
    $region11: #{forward.1} parent=1 // pred_check_branch
      %25 = sbr.rel (0) target = $region13
    $region12: #{forward.1} parent=1 // pred_region
      %s27 = ssub.s32 512, 512
      %28 = vsyncadd [#allocation6], %s27
      %s29 = sshll.u32 [#allocation5], 4
      %s30 = int_to_ptr.vmem [resolvable:$true] %s29
      %35 = dma.hbm_to_vmem [thread:$0]  %s2, 512, %s30, [#allocation6], 128, 128, 8
    $region13: #{forward.1} parent=1 // pred_fallthru
      _
    // Predicated region
    $region14: #{forward.1} parent=1 // pred_check
      _
    $region15: #{forward.1} parent=1 // pred_check_branch
      %37 = sbr.rel (0) target = $region17
    $region16: #{forward.1} parent=1 // pred_region
      _
    $region17: #{forward.1} parent=1 // pred_fallthru
      _
    // Predicated region
    $region18: #{forward.1} parent=1 // pred_check
      _
    $region19: #{forward.1} parent=1 // pred_check_branch
      %39 = sbr.rel (0) target = $region21
    $region20: #{forward.1} parent=1 // pred_region
      %40 = dma.done [#allocation3], 128
    $region21: #{forward.1} parent=1 // pred_fallthru
      _
    // Predicated region
    $region22: #{forward.1} parent=1 // pred_check
      _
    $region23: #{forward.1} parent=1 // pred_check_branch
      %42 = sbr.rel (0) target = $region25
    $region24: #{forward.1} parent=1 // pred_region
      %43 = dma.done [#allocation6], 512
    $region25: #{forward.1} parent=1 // pred_fallthru
      _
    %v44 = vld [vmem:[#allocation2] sm:$0xff]
    %v45 = vld [vmem:[%s1] sm:$0x3]
    %vm46 = vcmask 261120
    %v47 = vsel %vm46, %v44, 0.0
    %v48 = vrot.slane %v47, 4
    %v49 = vadd.f32 %v47, %v48
    %v50 = vrot.slane %v49, 2
    %v51 = vadd.f32 %v49, %v50
    %v52 = vrot.slane %v51, 1
    %v53 = vadd.f32 %v51, %v52
    %v54 = vmul.f32 %v53, 0.125
    %v55 = vmul.f32 %v44, %v44
    %v56 = vsel %vm46, %v55, 0.0
    %v57 = vrot.slane %v56, 4
    %v58 = vadd.f32 %v56, %v57
    %v59 = vrot.slane %v58, 2
    %v60 = vadd.f32 %v58, %v59
    %v61 = vrot.slane %v60, 1
    %v62 = vadd.f32 %v60, %v61
    %v63 = vmul.f32 %v62, 0.125
    %v64 = vmul.f32 %v54, %v54
    %v65 = vsub.f32 %v63, %v64
    %v66 = vadd.f32 %v65, 1e-05
    %v67 = vrsqrt.pop %v66
    %v68 = vmul.f32 %v45, %v67
    %v69 = vmul.f32 %v54, %v68
    %v71 = vrot.slane %v69, 7
    %v73 = vsub.f32 %v45, %v71
    %v74 = vlaneseq
    %v75 = vshrl.u32 %v74, 7
    %v76 = vsub.s32 0, %v75
    %v77 = vrot.slane %v68, %v76
    %v78 = vmul.f32 %v44, %v77
    %v79 = vlaneseq
    %v80 = vshrl.u32 %v79, 7
    %v81 = vsub.s32 1, %v80
    %v82 = vrot.slane %v73, %v81
    %v83 = vadd.f32 %v78, %v82
    %v84 = vld [vmem:[#allocation5] sm:$0xff]
    %v85 = vld [vmem:[#allocation5 + $0x8] sm:$0xff]
    %v86 = vld [vmem:[#allocation5 + $0x10] sm:$0xff]
    %v87 = vld [vmem:[#allocation5 + $0x18] sm:$0xff]
    %v88 = vld [vmem:[%s3] sm:$0x1]
    %v90 = vlaneseq
    %v91 = vshrl.u32 %v90, 7
    %v92 = vsub.s32 0, %v91
    %v93 = vrot.slane %v88, %v92
    %v96 = vsel %vm46, %v83, 0
    %98 = vmatprep.subr.mxu0 0.0
    %99 = vmatpush1.msra.mxu0 %v84
    %100 = vmatprep.subr.mxu0 0.0
    %101 = vmatpush1.msra.mxu0 %v85
    %102 = vmatprep.subr.mxu0 0.0
    %103 = vmatpush1.msra.mxu0 %v86
    %104 = vmatprep.subr.mxu0 0.0
    %105 = vmatpush1.msra.mxu0 %v87
    %106 = vmatprep.subr.mxu0 0.0
    %107 = vmatpush1.msra.mxu0 0.0
    %108 = vmatprep.subr.mxu0 0.0
    %109 = vmatpush1.msra.mxu0 0.0
    %110 = vmatprep.subr.mxu0 0.0
    %111 = vmatpush1.msra.mxu0 0.0
    %112 = vmatprep.subr.mxu0 0.0
    %113 = vmatpush1.msra.mxu0 0.0
    %114 = vmatprep.subr.mxu0 0.0
    %115 = vmatpush1.msra.mxu0 0.0
    %116 = vmatprep.subr.mxu0 0.0
    %117 = vmatpush1.msra.mxu0 0.0
    %118 = vmatprep.subr.mxu0 0.0
    %119 = vmatpush1.msra.mxu0 0.0
    %120 = vmatprep.subr.mxu0 0.0
    %121 = vmatpush1.msra.mxu0 0.0
    %122 = vmatprep.subr.mxu0 0.0
    %123 = vmatpush1.msra.mxu0 0.0
    %124 = vmatprep.subr.mxu0 0.0
    %125 = vmatpush1.msra.mxu0 0.0
    %126 = vmatprep.subr.mxu0 0.0
    %127 = vmatpush1.msra.mxu0 0.0
    %128 = vmatprep.subr.mxu0 0.0
    %129 = vmatpush1.msra.mxu0 0.0
    %130 = vmatprep.subr.mxu0 0.0
    %131 = vmatpush1.msra.mxu0 0.0
    %132 = vmatprep.subr.mxu0 0.0
    %133 = vmatpush1.msra.mxu0 0.0
    %134 = vmatprep.subr.mxu0 0.0
    %135 = vmatpush1.msra.mxu0 0.0
    %136 = vmatprep.subr.mxu0 0.0
    %137 = vmatpush1.msra.mxu0 0.0
    %138 = vmatprep.subr.mxu0 0.0
    %139 = vmatpush1.msra.mxu0 0.0
    %140 = vmatprep.subr.mxu0 0.0
    %141 = vmatpush1.msra.mxu0 0.0
    %142 = vmatprep.subr.mxu0 0.0
    %143 = vmatpush1.msra.mxu0 0.0
    %144 = vmatprep.subr.mxu0 0.0
    %145 = vmatpush1.msra.mxu0 0.0
    %146 = vmatprep.subr.mxu0 0.0
    %147 = vmatpush1.msra.mxu0 0.0
    %148 = vmatprep.subr.mxu0 0.0
    %149 = vmatpush1.msra.mxu0 0.0
    %150 = vmatprep.subr.mxu0 0.0
    %151 = vmatpush1.msra.mxu0 0.0
    %152 = vmatprep.subr.mxu0 0.0
    %153 = vmatpush1.msra.mxu0 0.0
    %154 = vmatprep.subr.mxu0 0.0
    %155 = vmatpush1.msra.mxu0 0.0
    %156 = vmatprep.subr.mxu0 0.0
    %157 = vmatpush1.msra.mxu0 0.0
    %158 = vmatprep.subr.mxu0 0.0
    %159 = vmatpush1.msra.mxu0 0.0
    %160 = vmatprep.subr.mxu0 0.0
    %161 = vmatpush1.msra.mxu0 0.0
    %162 = vmatprep.mubr.f32.mxu0 0.0
    %163 = vmatmul.mubr.f32.gmra.mrb[0].mxu0 %v96
    %v164 = vpop.f32.mrb[0].mxu0
    %v165 = vadd.f32 %v93, %v164
    %v166 = vpop.f32.mrb[0].mxu0
    %167 = vdwg.mxu0
    %v168 = vmul.f32 %v165, %v165
    %vm169 = vcmask 130048
    %v170 = vsel %vm169, %v168, 0.0
    %171 = vadd.xlane.f32.xlu0 %v170
    %v172 = vpop.xlane.xlu0 %171
    %v173 = vmax.f32 %v172, 1e-24
    %v174 = vrsqrt.pop %v173
    %v175 = vmul.f32 %v165, %v174
    %176 = vst.msk [vmem:[#allocation7] sm:$0xff] %vm169, %v175
    // Predicated region
    $region26: #{forward.1} parent=1 // pred_check
      _
    $region27: #{forward.1} parent=1 // pred_check_branch
      %178 = sbr.rel (0) target = $region29
    $region28: #{forward.1} parent=1 // pred_region
      %s180 = ssub.s32 128, 128
      %181 = vsyncadd [#allocation4], %s180
      %s183 = sshll.u32 [#allocation7], 4
      %s184 = int_to_ptr.vmem [resolvable:$true] %s183
      %186 = dma.vmem_to_hbm [thread:$0]  %s184, 128, %s4, [#allocation4]
    $region29: #{forward.1} parent=1 // pred_fallthru
      _
    // Predicated region
    $region30: #{forward.1} parent=1 // pred_check
      _
    $region31: #{forward.1} parent=1 // pred_check_branch
      %188 = sbr.rel (0) target = $region33
    $region32: #{forward.1} parent=1 // pred_region
      %189 = dma.done [#allocation4], 128
    $region33: #{forward.1} parent=1 // pred_fallthru
      _
    %190 = vsyncpa [#allocation3], 1
    %191 = vsyncpa [#allocation6], 1
    %192 = vsyncpa [#allocation4], 1

</llo_original>
